<compile_context>
chip_gen: v5e
topology: v5e:2x2
jax: 0.10.0
libtpu: 0.0.40
codegen_flags: <defaults>
</compile_context>

<pallas_src>
import jax
import jax.numpy as jnp
from jax.experimental import pallas as pl
from jax.experimental.pallas import tpu as pltpu


H1 = 256        # fc1 width (already lane-aligned)
H2_PAD = 128    # fc2 width (64) padded to one full lane register
OUT_PAD = 128   # fc3 width (output_dims) padded to lane-dense 128


def _round_up(x, m):
    return (x + m - 1) // m * m


def posenet_kernel(x_ref, w1_ref, s1_ref, t1_ref,
                   w2_ref, s2_ref, t2_ref,
                   w3_ref, b3_ref, o_ref):
    mm_dtype = w1_ref.dtype          # f32 by default; bf16 if the wrapper casts the weights
    x = x_ref[...].astype(mm_dtype)

    # --- layer 1: fc1 + (dropout = id) + bn1 (bias folded into affine) + leaky_relu(0.2) ---
    h = jnp.dot(x, w1_ref[...], preferred_element_type=jnp.float32)
    h = h * s1_ref[...] + t1_ref[...]
    h = jnp.maximum(h, 0.2 * h)

    # --- layer 2: fc2 + (dropout = id) + bn2 (bias folded into affine) + leaky_relu(0.2) ---
    h = jnp.dot(h.astype(mm_dtype), w2_ref[...], preferred_element_type=jnp.float32)
    h = h * s2_ref[...] + t2_ref[...]
    h = jnp.maximum(h, 0.2 * h)

    # --- layer 3: fc3 (output padded to 128 lanes -> unmasked stores) ---
    y = jnp.dot(h.astype(mm_dtype), w3_ref[...], preferred_element_type=jnp.float32)
    o_ref[...] = (y + b3_ref[...]).astype(o_ref.dtype)


def _fold_and_pad_params(params, mm_dtype):
    """Fold biases into the BN affine and zero-pad narrow dims to 128 lanes (trace-time glue)."""
    (w1, b1, s1, t1, w2, b2, s2, t2, w3, b3) = params
    h2 = w2.shape[1]
    out_dims = w3.shape[1]

    # Fold linear biases into the folded-BN affine: (h + b) * s + t == h * s + (b * s + t).
    t1f = b1 * s1 + t1
    t2f = b2 * s2 + t2

    # Zero-pad the 64-wide hidden and the output columns to full 128-lane width.
    w2p = jnp.pad(w2, ((0, 0), (0, H2_PAD - h2)))
    s2p = jnp.pad(s2, ((0, 0), (0, H2_PAD - h2)))
    t2p = jnp.pad(t2f, ((0, 0), (0, H2_PAD - h2)))
    w3p = jnp.pad(w3, ((0, H2_PAD - h2), (0, OUT_PAD - out_dims)))
    b3p = jnp.pad(b3, ((0, 0), (0, OUT_PAD - out_dims)))

    return (w1.astype(mm_dtype), s1, t1f,
            w2p.astype(mm_dtype), s2p, t2p,
            w3p.astype(mm_dtype), b3p), out_dims


def posenet_forward(x, params, *, tm=128, use_bf16_matmul=False):
    """Batch-tiled fused forward. Weights stay resident in VMEM across the batch grid."""
    mm_dtype = jnp.bfloat16 if use_bf16_matmul else jnp.float32
    (w1, s1, t1, w2, s2, t2, w3, b3), out_dims = _fold_and_pad_params(params, mm_dtype)

    B, D = x.shape
    TM = min(tm, _round_up(B, 8))          # batch tile (sublane-aligned)
    B_pad = _round_up(B, TM)
    if B_pad != B:
        x = jnp.pad(x, ((0, B_pad - B), (0, 0)))
    grid = (B_pad // TM,)

    wbytes = jnp.dtype(mm_dtype).itemsize
    vmem_bytes = max(
        16 * 1024 * 1024,
        4 * 2 * (TM * D + TM * OUT_PAD)                                   # x / out tiles (2x buf)
        + 2 * wbytes * (D * H1 + H1 * H2_PAD + H2_PAD * OUT_PAD)          # resident weights
        + 2 * 4 * (2 * H1 + 2 * H2_PAD + OUT_PAD)                         # affines / bias
        + (1 << 20),
    )

    const = lambda i: (0, 0)
    out = pl.pallas_call(
        posenet_kernel,
        out_shape=jax.ShapeDtypeStruct((B_pad, OUT_PAD), jnp.float32),
        grid_spec=pltpu.PrefetchScalarGridSpec(
            num_scalar_prefetch=0,
            grid=grid,
            in_specs=[
                pl.BlockSpec((TM, D), lambda i: (i, 0)),        # x tile
                pl.BlockSpec((D, H1), const),                   # w1
                pl.BlockSpec((1, H1), const),                   # s1
                pl.BlockSpec((1, H1), const),                   # t1 (bias folded)
                pl.BlockSpec((H1, H2_PAD), const),              # w2 (padded)
                pl.BlockSpec((1, H2_PAD), const),               # s2 (padded)
                pl.BlockSpec((1, H2_PAD), const),               # t2 (bias folded, padded)
                pl.BlockSpec((H2_PAD, OUT_PAD), const),         # w3 (padded)
                pl.BlockSpec((1, OUT_PAD), const),              # b3 (padded)
            ],
            out_specs=pl.BlockSpec((TM, OUT_PAD), lambda i: (i, 0)),
        ),
        compiler_params=pltpu.CompilerParams(
            dimension_semantics=("parallel",),
            vmem_limit_bytes=int(vmem_bytes),
        ),
    )(x, w1, s1, t1, w2, s2, t2, w3, b3)

    return out[:B, :out_dims]


def init_params(key, input_dims, output_dims):
    """Deterministic synthetic parameters with the shapes PoseNet.__init__ implies."""
    ks = jax.random.split(key, 10)

    def linear(kw, kb, din, dout):
        lim = 1.0 / jnp.sqrt(jnp.float32(din))
        w = jax.random.uniform(kw, (din, dout), jnp.float32, -lim, lim)
        b = jax.random.uniform(kb, (1, dout), jnp.float32, -lim, lim)
        return w, b

    w1, b1 = linear(ks[0], ks[1], input_dims, 256)
    w2, b2 = linear(ks[2], ks[3], 256, 64)
    w3, b3 = linear(ks[4], ks[5], 64, output_dims)

    def bn_fold(kg, kb2, dim):
        eps = 1e-5
        gamma = 1.0 + 0.1 * jax.random.normal(kg, (1, dim), jnp.float32)
        beta = 0.1 * jax.random.normal(kb2, (1, dim), jnp.float32)
        running_mean = jnp.zeros((1, dim), jnp.float32)
        running_var = jnp.ones((1, dim), jnp.float32)
        scale = gamma / jnp.sqrt(running_var + eps)
        shift = beta - running_mean * scale
        return scale, shift

    s1, t1 = bn_fold(ks[6], ks[7], 256)
    s2, t2 = bn_fold(ks[8], ks[9], 64)

    return (w1, b1, s1, t1, w2, b2, s2, t2, w3, b3)


def posenet_reference(x, params):
    """Plain-JAX reference of the same eval-mode forward (unfused biases)."""
    (w1, b1, s1, t1, w2, b2, s2, t2, w3, b3) = params
    h = x @ w1 + b1
    h = h * s1 + t1
    h = jnp.where(h > 0, h, 0.2 * h)
    h = h @ w2 + b2
    h = h * s2 + t2
    h = jnp.where(h > 0, h, 0.2 * h)
    return h @ w3 + b3


if __name__ == "__main__":
    # Small shapes consistent with the module: PoseNet(input_dims=128, output_dims=3), batch=8.
    B, INPUT_DIMS, OUTPUT_DIMS = 8, 128, 3

    key = jax.random.PRNGKey(0)
    kx, kp = jax.random.split(key)
    x = jax.random.normal(kx, (B, INPUT_DIMS), jnp.float32)
    params = init_params(kp, INPUT_DIMS, OUTPUT_DIMS)

    out = posenet_forward(x, params)           # f32 matmul path (validates to tight tolerance)
    out = jax.block_until_ready(out)

    ref = posenet_reference(x, params)
    assert out.shape == (B, OUTPUT_DIMS)
    assert jnp.allclose(out, ref, atol=1e-4, rtol=1e-4)

    print("KERNEL_OK")
</pallas_src>

<mosaic_0001>
module attributes {stable_mosaic.version = 11 : i64} {
  func.func @posenet_kernel(%arg0: i32, %arg1: memref<8x128xf32, #tpu.memory_space<vmem>>, %arg2: memref<128x256xf32, #tpu.memory_space<vmem>>, %arg3: memref<1x256xf32, #tpu.memory_space<vmem>>, %arg4: memref<1x256xf32, #tpu.memory_space<vmem>>, %arg5: memref<256x128xf32, #tpu.memory_space<vmem>>, %arg6: memref<1x128xf32, #tpu.memory_space<vmem>>, %arg7: memref<1x128xf32, #tpu.memory_space<vmem>>, %arg8: memref<128x128xf32, #tpu.memory_space<vmem>>, %arg9: memref<1x128xf32, #tpu.memory_space<vmem>>, %arg10: memref<8x128xf32, #tpu.memory_space<vmem>>) attributes {dimension_semantics = [#tpu.dimension_semantics<parallel>], iteration_bounds = array<i64: 1>, scalar_prefetch = 0 : i64, scratch_operands = 0 : i64, tpu.core_type = #tpu.core_type<tc>, window_params = [{transform_indices = @transform_0, window_bounds = array<i64: 8, 128>}, {pipeline_mode = #tpu.pipeline_mode<synchronous>, transform_indices = @transform_1, window_bounds = array<i64: 128, 256>}, {pipeline_mode = #tpu.pipeline_mode<synchronous>, transform_indices = @transform_2, window_bounds = array<i64: 1, 256>}, {pipeline_mode = #tpu.pipeline_mode<synchronous>, transform_indices = @transform_3, window_bounds = array<i64: 1, 256>}, {pipeline_mode = #tpu.pipeline_mode<synchronous>, transform_indices = @transform_4, window_bounds = array<i64: 256, 128>}, {pipeline_mode = #tpu.pipeline_mode<synchronous>, transform_indices = @transform_5, window_bounds = array<i64: 1, 128>}, {pipeline_mode = #tpu.pipeline_mode<synchronous>, transform_indices = @transform_6, window_bounds = array<i64: 1, 128>}, {pipeline_mode = #tpu.pipeline_mode<synchronous>, transform_indices = @transform_7, window_bounds = array<i64: 128, 128>}, {pipeline_mode = #tpu.pipeline_mode<synchronous>, transform_indices = @transform_8, window_bounds = array<i64: 1, 128>}, {transform_indices = @transform_9, window_bounds = array<i64: 8, 128>}]} {
    %c0 = arith.constant 0 : index
    %c0_0 = arith.constant 0 : index
    %0 = vector.load %arg1[%c0, %c0_0] : memref<8x128xf32, #tpu.memory_space<vmem>>, vector<8x128xf32>
    %c0_1 = arith.constant 0 : index
    %c0_2 = arith.constant 0 : index
    %1 = vector.load %arg2[%c0_1, %c0_2] : memref<128x256xf32, #tpu.memory_space<vmem>>, vector<128x256xf32>
    %cst = arith.constant dense<0.000000e+00> : vector<8x256xf32>
    %2 = tpu.matmul %0, %1, %cst {dimension_numbers = #tpu.dot_dimension_numbers<[1], [0], [0], [1], [0, 0, 1, 1], [], []>} : vector<8x128xf32>, vector<128x256xf32>, vector<8x256xf32> -> vector<8x256xf32>
    %c0_3 = arith.constant 0 : index
    %c0_4 = arith.constant 0 : index
    %3 = vector.load %arg3[%c0_3, %c0_4] : memref<1x256xf32, #tpu.memory_space<vmem>>, vector<1x256xf32>
    %4 = vector.broadcast %3 : vector<1x256xf32> to vector<8x256xf32>
    %5 = arith.mulf %2, %4 : vector<8x256xf32>
    %c0_5 = arith.constant 0 : index
    %c0_6 = arith.constant 0 : index
    %6 = vector.load %arg4[%c0_5, %c0_6] : memref<1x256xf32, #tpu.memory_space<vmem>>, vector<1x256xf32>
    %7 = vector.broadcast %6 : vector<1x256xf32> to vector<8x256xf32>
    %8 = arith.addf %5, %7 : vector<8x256xf32>
    %cst_7 = arith.constant 2.000000e-01 : f32
    %9 = vector.broadcast %cst_7 : f32 to vector<8x256xf32>
    %10 = arith.mulf %9, %8 : vector<8x256xf32>
    %11 = arith.maximumf %8, %10 : vector<8x256xf32>
    %c0_8 = arith.constant 0 : index
    %c0_9 = arith.constant 0 : index
    %12 = vector.load %arg5[%c0_8, %c0_9] : memref<256x128xf32, #tpu.memory_space<vmem>>, vector<256x128xf32>
    %cst_10 = arith.constant dense<0.000000e+00> : vector<8x128xf32>
    %13 = tpu.matmul %11, %12, %cst_10 {dimension_numbers = #tpu.dot_dimension_numbers<[1], [0], [0], [1], [0, 0, 1, 1], [], []>} : vector<8x256xf32>, vector<256x128xf32>, vector<8x128xf32> -> vector<8x128xf32>
    %c0_11 = arith.constant 0 : index
    %c0_12 = arith.constant 0 : index
    %14 = vector.load %arg6[%c0_11, %c0_12] : memref<1x128xf32, #tpu.memory_space<vmem>>, vector<1x128xf32>
    %15 = vector.broadcast %14 : vector<1x128xf32> to vector<8x128xf32>
    %16 = arith.mulf %13, %15 : vector<8x128xf32>
    %c0_13 = arith.constant 0 : index
    %c0_14 = arith.constant 0 : index
    %17 = vector.load %arg7[%c0_13, %c0_14] : memref<1x128xf32, #tpu.memory_space<vmem>>, vector<1x128xf32>
    %18 = vector.broadcast %17 : vector<1x128xf32> to vector<8x128xf32>
    %19 = arith.addf %16, %18 : vector<8x128xf32>
    %cst_15 = arith.constant 2.000000e-01 : f32
    %20 = vector.broadcast %cst_15 : f32 to vector<8x128xf32>
    %21 = arith.mulf %20, %19 : vector<8x128xf32>
    %22 = arith.maximumf %19, %21 : vector<8x128xf32>
    %c0_16 = arith.constant 0 : index
    %c0_17 = arith.constant 0 : index
    %23 = vector.load %arg8[%c0_16, %c0_17] : memref<128x128xf32, #tpu.memory_space<vmem>>, vector<128x128xf32>
    %cst_18 = arith.constant dense<0.000000e+00> : vector<8x128xf32>
    %24 = tpu.matmul %22, %23, %cst_18 {dimension_numbers = #tpu.dot_dimension_numbers<[1], [0], [0], [1], [0, 0, 1, 1], [], []>} : vector<8x128xf32>, vector<128x128xf32>, vector<8x128xf32> -> vector<8x128xf32>
    %c0_19 = arith.constant 0 : index
    %c0_20 = arith.constant 0 : index
    %25 = vector.load %arg9[%c0_19, %c0_20] : memref<1x128xf32, #tpu.memory_space<vmem>>, vector<1x128xf32>
    %26 = vector.broadcast %25 : vector<1x128xf32> to vector<8x128xf32>
    %27 = arith.addf %24, %26 : vector<8x128xf32>
    %c0_21 = arith.constant 0 : index
    %c0_22 = arith.constant 0 : index
    %28 = vector.load %arg10[%c0_21, %c0_22] : memref<8x128xf32, #tpu.memory_space<vmem>>, vector<8x128xf32>
    tpu.vector_store %arg10[%c0_21, %c0_22], %27 {strides = array<i32>} : memref<8x128xf32, #tpu.memory_space<vmem>>, vector<8x128xf32>,
    return
  }
  func.func @transform_0(%arg0: i32) -> (i32, i32) {
    %c0_i32 = arith.constant 0 : i32
    %c0_i32_0 = arith.constant 0 : i32
    return %arg0, %c0_i32 : i32, i32
  }
  func.func @transform_1(%arg0: i32) -> (i32, i32) {
    %c0_i32 = arith.constant 0 : i32
    %c0_i32_0 = arith.constant 0 : i32
    %c0_i32_1 = arith.constant 0 : i32
    return %c0_i32, %c0_i32_0 : i32, i32
  }
  func.func @transform_2(%arg0: i32) -> (i32, i32) {
    %c0_i32 = arith.constant 0 : i32
    %c0_i32_0 = arith.constant 0 : i32
    %c0_i32_1 = arith.constant 0 : i32
    return %c0_i32, %c0_i32_0 : i32, i32
  }
  func.func @transform_3(%arg0: i32) -> (i32, i32) {
    %c0_i32 = arith.constant 0 : i32
    %c0_i32_0 = arith.constant 0 : i32
    %c0_i32_1 = arith.constant 0 : i32
    return %c0_i32, %c0_i32_0 : i32, i32
  }
  func.func @transform_4(%arg0: i32) -> (i32, i32) {
    %c0_i32 = arith.constant 0 : i32
    %c0_i32_0 = arith.constant 0 : i32
    %c0_i32_1 = arith.constant 0 : i32
    return %c0_i32, %c0_i32_0 : i32, i32
  }
  func.func @transform_5(%arg0: i32) -> (i32, i32) {
    %c0_i32 = arith.constant 0 : i32
    %c0_i32_0 = arith.constant 0 : i32
    %c0_i32_1 = arith.constant 0 : i32
    return %c0_i32, %c0_i32_0 : i32, i32
  }
  func.func @transform_6(%arg0: i32) -> (i32, i32) {
    %c0_i32 = arith.constant 0 : i32
    %c0_i32_0 = arith.constant 0 : i32
    %c0_i32_1 = arith.constant 0 : i32
    return %c0_i32, %c0_i32_0 : i32, i32
  }
  func.func @transform_7(%arg0: i32) -> (i32, i32) {
    %c0_i32 = arith.constant 0 : i32
    %c0_i32_0 = arith.constant 0 : i32
    %c0_i32_1 = arith.constant 0 : i32
    return %c0_i32, %c0_i32_0 : i32, i32
  }
  func.func @transform_8(%arg0: i32) -> (i32, i32) {
    %c0_i32 = arith.constant 0 : i32
    %c0_i32_0 = arith.constant 0 : i32
    %c0_i32_1 = arith.constant 0 : i32
    return %c0_i32, %c0_i32_0 : i32, i32
  }
  func.func @transform_9(%arg0: i32) -> (i32, i32) {
    %c0_i32 = arith.constant 0 : i32
    %c0_i32_0 = arith.constant 0 : i32
    return %arg0, %c0_i32 : i32, i32
  }
}

</mosaic_0001>

<llo_original>
// kernel: tpu_custom_call.1
$region0: #{tpu_custom_call.1}
  #allocation0 [shape = 'u32[]', space=smem, size = 0x4, offset = 0x4, fixed_abs, tag = 'smem constant byte address 0x4 - core index']
  #allocation1 [shape = 'u32[72,128]{1,0:T(1,128)}', space=vmem, size = 0x9000, scoped, tag = 'internal scratch']
  %s0 = inlined_call_operand.hbm [shape: f32[8,128], index: 0, kind: input, shape index: {}]
  %s1 = inlined_call_operand.hbm [shape: f32[128,256], index: 1, kind: input, shape index: {}]
  %s2 = inlined_call_operand.hbm [shape: f32[1,256], index: 2, kind: input, shape index: {}]
  %s3 = inlined_call_operand.vmem [shape: f32[1,256], index: 3, kind: input, shape index: {}]
  %s4 = inlined_call_operand.hbm [shape: f32[256,128], index: 4, kind: input, shape index: {}]
  %s5 = inlined_call_operand.vmem [shape: f32[1,128], index: 5, kind: input, shape index: {}]
  %s6 = inlined_call_operand.vmem [shape: f32[1,128], index: 6, kind: input, shape index: {}]
  %s7 = inlined_call_operand.hbm [shape: f32[128,128], index: 7, kind: input, shape index: {}]
  %s8 = inlined_call_operand.vmem [shape: f32[1,128], index: 8, kind: input, shape index: {}]
  %s9 = inlined_call_operand.hbm [shape: f32[8,128], index: 9, kind: output, shape index: {}]
  %s10 = sld [smem:[#allocation0]]
  $region66: #{tpu_custom_call.1} parent=0
    _
  %s12 = ssub.s32 1, %s10
  %s13 = scalar_select 0, %s12, %s10
  $region1: #{tpu_custom_call.1} parent=0
    #allocation2 [shape = 'u8[4096]{0}', space=vmem, size = 0x1000, scoped, tag = 'input window, operand 0, single buffered']
    #allocation3 [shape = 's32[1]{0}', space=sflag, size = 0x4, scoped, tag = 'scoped memory for tpu_custom_call.1']
    #allocation4 [shape = 's32[1]{0}', space=sflag, size = 0x4, scoped, tag = 'scoped memory for tpu_custom_call.1']
    #allocation5 [shape = 'u8[131072]{0}', space=vmem, size = 0x20000, scoped, tag = 'input window, operand 1, single buffered']
    #allocation6 [shape = 's32[1]{0}', space=sflag, size = 0x4, scoped, tag = 'scoped memory for tpu_custom_call.1']
    #allocation7 [shape = 'u8[1024]{0}', space=vmem, size = 0x400, scoped, tag = 'input window, operand 2, single buffered']
    #allocation8 [shape = 'u8[131072]{0}', space=vmem, size = 0x20000, scoped, tag = 'input window, operand 4, single buffered']
    #allocation9 [shape = 's32[1]{0}', space=sflag, size = 0x4, scoped, tag = 'scoped memory for tpu_custom_call.1']
    #allocation10 [shape = 'u8[65536]{0}', space=vmem, size = 0x10000, scoped, tag = 'input window, operand 7, single buffered']
    #allocation11 [shape = 'u8[4096]{0}', space=vmem, size = 0x1000, scoped, tag = 'output window, operand 0, single buffered']
    %14 = vsyncpa [#allocation3], 0
    %15 = vsyncpa [#allocation6], 0
    %16 = vsyncpa [#allocation9], 0
    %17 = vsyncpa [#allocation4], 0
    // Predicated region
    $region2: #{tpu_custom_call.1} parent=1 // pred_check
      _
    $region3: #{tpu_custom_call.1} parent=1 // pred_check_branch
      %19 = sbr.rel (0) target = $region5
    $region4: #{tpu_custom_call.1} parent=1 // pred_region
      %21 = vsyncadd [#allocation3], 0
      %s23 = sshll.u32 %s0, 4
      %s24 = int_to_ptr.hbm [resolvable:$true] %s23
      %s25 = sshll.u32 [#allocation2], 4
      %s26 = int_to_ptr.vmem [resolvable:$true] %s25
      %28 = dma.hbm_to_vmem [thread:$0]  %s24, 128, %s26, [#allocation3]
    $region5: #{tpu_custom_call.1} parent=1 // pred_fallthru
      _
    // Predicated region
    $region6: #{tpu_custom_call.1} parent=1 // pred_check
      _
    $region7: #{tpu_custom_call.1} parent=1 // pred_check_branch
      %30 = sbr.rel (0) target = $region9
    $region8: #{tpu_custom_call.1} parent=1 // pred_region
      %32 = vsyncadd [#allocation6], 0
      %s33 = sshll.u32 %s1, 4
      %s34 = int_to_ptr.hbm [resolvable:$true] %s33
      %s35 = sshll.u32 [#allocation5], 4
      %s36 = int_to_ptr.vmem [resolvable:$true] %s35
      %41 = dma.hbm_to_vmem [thread:$0]  %s34, 4096, %s36, [#allocation6], 256, 256, 16
    $region9: #{tpu_custom_call.1} parent=1 // pred_fallthru
      _
    // Predicated region
    $region10: #{tpu_custom_call.1} parent=1 // pred_check
      _
    $region11: #{tpu_custom_call.1} parent=1 // pred_check_branch
      %43 = sbr.rel (0) target = $region13
    $region12: #{tpu_custom_call.1} parent=1 // pred_region
      %45 = vsyncadd [#allocation6], 0
      %s47 = sshll.u32 %s2, 4
      %s48 = int_to_ptr.hbm [resolvable:$true] %s47
      %s49 = sshll.u32 [#allocation7], 4
      %s50 = int_to_ptr.vmem [resolvable:$true] %s49
      %52 = dma.hbm_to_vmem [thread:$0]  %s48, 32, %s50, [#allocation6]
    $region13: #{tpu_custom_call.1} parent=1 // pred_fallthru
      _
    // Predicated region
    $region14: #{tpu_custom_call.1} parent=1 // pred_check
      _
    $region15: #{tpu_custom_call.1} parent=1 // pred_check_branch
      %54 = sbr.rel (0) target = $region17
    $region16: #{tpu_custom_call.1} parent=1 // pred_region
      _
    $region17: #{tpu_custom_call.1} parent=1 // pred_fallthru
      _
    // Predicated region
    $region18: #{tpu_custom_call.1} parent=1 // pred_check
      _
    $region19: #{tpu_custom_call.1} parent=1 // pred_check_branch
      %56 = sbr.rel (0) target = $region21
    $region20: #{tpu_custom_call.1} parent=1 // pred_region
      %58 = vsyncadd [#allocation9], 0
      %s59 = sshll.u32 %s4, 4
      %s60 = int_to_ptr.hbm [resolvable:$true] %s59
      %s61 = sshll.u32 [#allocation8], 4
      %s62 = int_to_ptr.vmem [resolvable:$true] %s61
      %67 = dma.hbm_to_vmem [thread:$0]  %s60, 4096, %s62, [#allocation9], 128, 128, 8
    $region21: #{tpu_custom_call.1} parent=1 // pred_fallthru
      _
    // Predicated region
    $region22: #{tpu_custom_call.1} parent=1 // pred_check
      _
    $region23: #{tpu_custom_call.1} parent=1 // pred_check_branch
      %69 = sbr.rel (0) target = $region25
    $region24: #{tpu_custom_call.1} parent=1 // pred_region
      _
    $region25: #{tpu_custom_call.1} parent=1 // pred_fallthru
      _
    // Predicated region
    $region26: #{tpu_custom_call.1} parent=1 // pred_check
      _
    $region27: #{tpu_custom_call.1} parent=1 // pred_check_branch
      %71 = sbr.rel (0) target = $region29
    $region28: #{tpu_custom_call.1} parent=1 // pred_region
      _
    $region29: #{tpu_custom_call.1} parent=1 // pred_fallthru
      _
    // Predicated region
    $region30: #{tpu_custom_call.1} parent=1 // pred_check
      _
    $region31: #{tpu_custom_call.1} parent=1 // pred_check_branch
      %73 = sbr.rel (0) target = $region33
    $region32: #{tpu_custom_call.1} parent=1 // pred_region
      %75 = vsyncadd [#allocation9], 0
      %s76 = sshll.u32 %s7, 4
      %s77 = int_to_ptr.hbm [resolvable:$true] %s76
      %s78 = sshll.u32 [#allocation10], 4
      %s79 = int_to_ptr.vmem [resolvable:$true] %s78
      %84 = dma.hbm_to_vmem [thread:$0]  %s77, 2048, %s79, [#allocation9], 128, 128, 8
    $region33: #{tpu_custom_call.1} parent=1 // pred_fallthru
      _
    // Predicated region
    $region34: #{tpu_custom_call.1} parent=1 // pred_check
      _
    $region35: #{tpu_custom_call.1} parent=1 // pred_check_branch
      %86 = sbr.rel (0) target = $region37
    $region36: #{tpu_custom_call.1} parent=1 // pred_region
      _
    $region37: #{tpu_custom_call.1} parent=1 // pred_fallthru
      _
    // Predicated region
    $region38: #{tpu_custom_call.1} parent=1 // pred_check
      _
    $region39: #{tpu_custom_call.1} parent=1 // pred_check_branch
      %88 = sbr.rel (0) target = $region41
    $region40: #{tpu_custom_call.1} parent=1 // pred_region
      %90 = dma.done [#allocation3], 128
    $region41: #{tpu_custom_call.1} parent=1 // pred_fallthru
      _
    // Predicated region
    $region42: #{tpu_custom_call.1} parent=1 // pred_check
      _
    $region43: #{tpu_custom_call.1} parent=1 // pred_check_branch
      %92 = sbr.rel (0) target = $region45
    $region44: #{tpu_custom_call.1} parent=1 // pred_region
      %94 = dma.done [#allocation6], 4096
    $region45: #{tpu_custom_call.1} parent=1 // pred_fallthru
      _
    // Predicated region
    $region46: #{tpu_custom_call.1} parent=1 // pred_check
      _
    $region47: #{tpu_custom_call.1} parent=1 // pred_check_branch
      %96 = sbr.rel (0) target = $region49
    $region48: #{tpu_custom_call.1} parent=1 // pred_region
      %98 = dma.done [#allocation6], 32
    $region49: #{tpu_custom_call.1} parent=1 // pred_fallthru
      _
    // Predicated region
    $region50: #{tpu_custom_call.1} parent=1 // pred_check
      _
    $region51: #{tpu_custom_call.1} parent=1 // pred_check_branch
      %100 = sbr.rel (0) target = $region53
    $region52: #{tpu_custom_call.1} parent=1 // pred_region
      %102 = dma.done [#allocation9], 4096
    $region53: #{tpu_custom_call.1} parent=1 // pred_fallthru
      _
    // Predicated region
    $region54: #{tpu_custom_call.1} parent=1 // pred_check
      _
    $region55: #{tpu_custom_call.1} parent=1 // pred_check_branch
      %104 = sbr.rel (0) target = $region57
    $region56: #{tpu_custom_call.1} parent=1 // pred_region
      %106 = dma.done [#allocation9], 2048
    $region57: #{tpu_custom_call.1} parent=1 // pred_fallthru
      _
    %v107 = vld [vmem:[#allocation2] sm:$0xff]
    %v108 = vld [vmem:[#allocation5] sm:$0xff]
    %v109 = vld [vmem:[#allocation5 + $0x8] sm:$0xff]
    %v110 = vld [vmem:[#allocation5 + $0x10] sm:$0xff]
    %v111 = vld [vmem:[#allocation5 + $0x18] sm:$0xff]
    %v112 = vld [vmem:[#allocation5 + $0x20] sm:$0xff]
    %v113 = vld [vmem:[#allocation5 + $0x28] sm:$0xff]
    %v114 = vld [vmem:[#allocation5 + $0x30] sm:$0xff]
    %v115 = vld [vmem:[#allocation5 + $0x38] sm:$0xff]
    %v116 = vld [vmem:[#allocation5 + $0x40] sm:$0xff]
    %v117 = vld [vmem:[#allocation5 + $0x48] sm:$0xff]
    %v118 = vld [vmem:[#allocation5 + $0x50] sm:$0xff]
    %v119 = vld [vmem:[#allocation5 + $0x58] sm:$0xff]
    %v120 = vld [vmem:[#allocation5 + $0x60] sm:$0xff]
    %v121 = vld [vmem:[#allocation5 + $0x68] sm:$0xff]
    %v122 = vld [vmem:[#allocation5 + $0x70] sm:$0xff]
    %v123 = vld [vmem:[#allocation5 + $0x78] sm:$0xff]
    %v124 = vld [vmem:[#allocation5 + $0x80] sm:$0xff]
    %v125 = vld [vmem:[#allocation5 + $0x88] sm:$0xff]
    %v126 = vld [vmem:[#allocation5 + $0x90] sm:$0xff]
    %v127 = vld [vmem:[#allocation5 + $0x98] sm:$0xff]
    %v128 = vld [vmem:[#allocation5 + $0xa0] sm:$0xff]
    %v129 = vld [vmem:[#allocation5 + $0xa8] sm:$0xff]
    %v130 = vld [vmem:[#allocation5 + $0xb0] sm:$0xff]
    %v131 = vld [vmem:[#allocation5 + $0xb8] sm:$0xff]
    %v132 = vld [vmem:[#allocation5 + $0xc0] sm:$0xff]
    %v133 = vld [vmem:[#allocation5 + $0xc8] sm:$0xff]
    %v134 = vld [vmem:[#allocation5 + $0xd0] sm:$0xff]
    %v135 = vld [vmem:[#allocation5 + $0xd8] sm:$0xff]
    %v136 = vld [vmem:[#allocation5 + $0xe0] sm:$0xff]
    %v137 = vld [vmem:[#allocation5 + $0xe8] sm:$0xff]
    %v138 = vld [vmem:[#allocation5 + $0xf0] sm:$0xff]
    %v139 = vld [vmem:[#allocation5 + $0xf8] sm:$0xff]
    %140 = vmatpush.msra.mxu0 %v138
    %141 = vmatpush.msra.mxu0 %v136
    %142 = vmatpush.msra.mxu0 %v134
    %143 = vmatpush.msra.mxu0 %v132
    %144 = vmatpush.msra.mxu0 %v130
    %145 = vmatpush.msra.mxu0 %v128
    %146 = vmatpush.msra.mxu0 %v126
    %147 = vmatpush.msra.mxu0 %v124
    %148 = vmatpush.msra.mxu0 %v122
    %149 = vmatpush.msra.mxu0 %v120
    %150 = vmatpush.msra.mxu0 %v118
    %151 = vmatpush.msra.mxu0 %v116
    %152 = vmatpush.msra.mxu0 %v114
    %153 = vmatpush.msra.mxu0 %v112
    %154 = vmatpush.msra.mxu0 %v110
    %155 = vmatpush.msra.mxu0 %v108
    %156 = vmatmul.f32.gmra.mxu0 %v107
    %v157 = vpop.f32.mrf.mxu0
    %v158 = vadd.f32 0.0, %v157
    %159 = vdwg.mxu0
    %160 = vmatpush.msra.mxu0 %v139
    %161 = vmatpush.msra.mxu0 %v137
    %162 = vmatpush.msra.mxu0 %v135
    %163 = vmatpush.msra.mxu0 %v133
    %164 = vmatpush.msra.mxu0 %v131
    %165 = vmatpush.msra.mxu0 %v129
    %166 = vmatpush.msra.mxu0 %v127
    %167 = vmatpush.msra.mxu0 %v125
    %168 = vmatpush.msra.mxu0 %v123
    %169 = vmatpush.msra.mxu0 %v121
    %170 = vmatpush.msra.mxu0 %v119
    %171 = vmatpush.msra.mxu0 %v117
    %172 = vmatpush.msra.mxu0 %v115
    %173 = vmatpush.msra.mxu0 %v113
    %174 = vmatpush.msra.mxu0 %v111
    %175 = vmatpush.msra.mxu0 %v109
    %176 = vmatmul.f32.gmra.mxu0 %v107
    %v177 = vpop.f32.mrf.mxu0
    %v178 = vadd.f32 0.0, %v177
    %179 = vdwg.mxu0
    %v180 = vld [vmem:[#allocation7] sm:$0x3]
    %v182 = vperm.slane %v180, 0
    %v183 = vperm.slane %v180, 1
    %v186 = vmul.f32 %v158, %v182
    %v187 = vmul.f32 %v178, %v183
    %v188 = vld [vmem:[%s3] sm:$0x3]
    %v190 = vperm.slane %v188, 0
    %v191 = vperm.slane %v188, 1
    %v194 = vadd.f32 %v186, %v190
    %v195 = vadd.f32 %v187, %v191
    %v196 = vmul.f32 %v194, 0.2
    %v197 = vmul.f32 %v195, 0.2
    %v198 = vmax.f32 %v194, %v196
    %v199 = vmax.f32 %v195, %v197
    %v200 = vld [vmem:[#allocation8] sm:$0xff]
    %v201 = vld [vmem:[#allocation8 + $0x8] sm:$0xff]
    %v202 = vld [vmem:[#allocation8 + $0x10] sm:$0xff]
    %v203 = vld [vmem:[#allocation8 + $0x18] sm:$0xff]
    %v204 = vld [vmem:[#allocation8 + $0x20] sm:$0xff]
    %v205 = vld [vmem:[#allocation8 + $0x28] sm:$0xff]
    %v206 = vld [vmem:[#allocation8 + $0x30] sm:$0xff]
    %v207 = vld [vmem:[#allocation8 + $0x38] sm:$0xff]
    %v208 = vld [vmem:[#allocation8 + $0x40] sm:$0xff]
    %v209 = vld [vmem:[#allocation8 + $0x48] sm:$0xff]
    %v210 = vld [vmem:[#allocation8 + $0x50] sm:$0xff]
    %v211 = vld [vmem:[#allocation8 + $0x58] sm:$0xff]
    %v212 = vld [vmem:[#allocation8 + $0x60] sm:$0xff]
    %v213 = vld [vmem:[#allocation8 + $0x68] sm:$0xff]
    %v214 = vld [vmem:[#allocation8 + $0x70] sm:$0xff]
    %v215 = vld [vmem:[#allocation8 + $0x78] sm:$0xff]
    %v216 = vld [vmem:[#allocation8 + $0x80] sm:$0xff]
    %v217 = vld [vmem:[#allocation8 + $0x88] sm:$0xff]
    %v218 = vld [vmem:[#allocation8 + $0x90] sm:$0xff]
    %v219 = vld [vmem:[#allocation8 + $0x98] sm:$0xff]
    %v220 = vld [vmem:[#allocation8 + $0xa0] sm:$0xff]
    %v221 = vld [vmem:[#allocation8 + $0xa8] sm:$0xff]
    %v222 = vld [vmem:[#allocation8 + $0xb0] sm:$0xff]
    %v223 = vld [vmem:[#allocation8 + $0xb8] sm:$0xff]
    %v224 = vld [vmem:[#allocation8 + $0xc0] sm:$0xff]
    %v225 = vld [vmem:[#allocation8 + $0xc8] sm:$0xff]
    %v226 = vld [vmem:[#allocation8 + $0xd0] sm:$0xff]
    %v227 = vld [vmem:[#allocation8 + $0xd8] sm:$0xff]
    %v228 = vld [vmem:[#allocation8 + $0xe0] sm:$0xff]
    %v229 = vld [vmem:[#allocation8 + $0xe8] sm:$0xff]
    %v230 = vld [vmem:[#allocation8 + $0xf0] sm:$0xff]
    %v231 = vld [vmem:[#allocation8 + $0xf8] sm:$0xff]
    %232 = vmatpush.msra.mxu0 %v215
    %233 = vmatpush.msra.mxu0 %v214
    %234 = vmatpush.msra.mxu0 %v213
    %235 = vmatpush.msra.mxu0 %v212
    %236 = vmatpush.msra.mxu0 %v211
    %237 = vmatpush.msra.mxu0 %v210
    %238 = vmatpush.msra.mxu0 %v209
    %239 = vmatpush.msra.mxu0 %v208
    %240 = vmatpush.msra.mxu0 %v207
    %241 = vmatpush.msra.mxu0 %v206
    %242 = vmatpush.msra.mxu0 %v205
    %243 = vmatpush.msra.mxu0 %v204
    %244 = vmatpush.msra.mxu0 %v203
    %245 = vmatpush.msra.mxu0 %v202
    %246 = vmatpush.msra.mxu0 %v201
    %247 = vmatpush.msra.mxu0 %v200
    %248 = vmatmul.f32.gmra.mxu0 %v198
    %v249 = vpop.f32.mrf.mxu0
    %v250 = vadd.f32 0.0, %v249
    %251 = vdwg.mxu0
    %252 = vmatpush.msra.mxu0 %v231
    %253 = vmatpush.msra.mxu0 %v230
    %254 = vmatpush.msra.mxu0 %v229
    %255 = vmatpush.msra.mxu0 %v228
    %256 = vmatpush.msra.mxu0 %v227
    %257 = vmatpush.msra.mxu0 %v226
    %258 = vmatpush.msra.mxu0 %v225
    %259 = vmatpush.msra.mxu0 %v224
    %260 = vmatpush.msra.mxu0 %v223
    %261 = vmatpush.msra.mxu0 %v222
    %262 = vmatpush.msra.mxu0 %v221
    %263 = vmatpush.msra.mxu0 %v220
    %264 = vmatpush.msra.mxu0 %v219
    %265 = vmatpush.msra.mxu0 %v218
    %266 = vmatpush.msra.mxu0 %v217
    %267 = vmatpush.msra.mxu0 %v216
    %268 = vmatmul.f32.gmra.mxu0 %v199
    %v269 = vpop.f32.mrf.mxu0
    %v270 = vadd.f32 %v250, %v269
    %271 = vdwg.mxu0
    %v272 = vld [vmem:[%s5] sm:$0x1]
    %v274 = vperm.slane %v272, 0
    %v276 = vmul.f32 %v270, %v274
    %v277 = vld [vmem:[%s6] sm:$0x1]
    %v279 = vperm.slane %v277, 0
    %v281 = vadd.f32 %v276, %v279
    %v282 = vmul.f32 %v281, 0.2
    %v283 = vmax.f32 %v281, %v282
    %v284 = vld [vmem:[#allocation10] sm:$0xff]
    %v285 = vld [vmem:[#allocation10 + $0x8] sm:$0xff]
    %v286 = vld [vmem:[#allocation10 + $0x10] sm:$0xff]
    %v287 = vld [vmem:[#allocation10 + $0x18] sm:$0xff]
    %v288 = vld [vmem:[#allocation10 + $0x20] sm:$0xff]
    %v289 = vld [vmem:[#allocation10 + $0x28] sm:$0xff]
    %v290 = vld [vmem:[#allocation10 + $0x30] sm:$0xff]
    %v291 = vld [vmem:[#allocation10 + $0x38] sm:$0xff]
    %v292 = vld [vmem:[#allocation10 + $0x40] sm:$0xff]
    %v293 = vld [vmem:[#allocation10 + $0x48] sm:$0xff]
    %v294 = vld [vmem:[#allocation10 + $0x50] sm:$0xff]
    %v295 = vld [vmem:[#allocation10 + $0x58] sm:$0xff]
    %v296 = vld [vmem:[#allocation10 + $0x60] sm:$0xff]
    %v297 = vld [vmem:[#allocation10 + $0x68] sm:$0xff]
    %v298 = vld [vmem:[#allocation10 + $0x70] sm:$0xff]
    %v299 = vld [vmem:[#allocation10 + $0x78] sm:$0xff]
    %v300 = vld [vmem:[%s8] sm:$0x1]
    %v302 = vperm.slane %v300, 0
    %304 = vmatpush.msra.mxu0 %v299
    %305 = vmatpush.msra.mxu0 %v298
    %306 = vmatpush.msra.mxu0 %v297
    %307 = vmatpush.msra.mxu0 %v296
    %308 = vmatpush.msra.mxu0 %v295
    %309 = vmatpush.msra.mxu0 %v294
    %310 = vmatpush.msra.mxu0 %v293
    %311 = vmatpush.msra.mxu0 %v292
    %312 = vmatpush.msra.mxu0 %v291
    %313 = vmatpush.msra.mxu0 %v290
    %314 = vmatpush.msra.mxu0 %v289
    %315 = vmatpush.msra.mxu0 %v288
    %316 = vmatpush.msra.mxu0 %v287
    %317 = vmatpush.msra.mxu0 %v286
    %318 = vmatpush.msra.mxu0 %v285
    %319 = vmatpush.msra.mxu0 %v284
    %320 = vmatmul.f32.gmra.mxu0 %v283
    %v321 = vpop.f32.mrf.mxu0
    %v322 = vadd.f32 %v302, %v321
    %323 = vdwg.mxu0
    %324 = vst [vmem:[#allocation11] sm:$0xff] %v322
    // Predicated region
    $region58: #{tpu_custom_call.1} parent=1 // pred_check
      _
    $region59: #{tpu_custom_call.1} parent=1 // pred_check_branch
      %326 = sbr.rel (0) target = $region61
    $region60: #{tpu_custom_call.1} parent=1 // pred_region
      %328 = vsyncadd [#allocation4], 0
      %s330 = sshll.u32 [#allocation11], 4
      %s331 = int_to_ptr.vmem [resolvable:$true] %s330
      %s332 = sshll.u32 %s9, 4
      %s333 = int_to_ptr.hbm [resolvable:$true] %s332
      %335 = dma.vmem_to_hbm [thread:$0]  %s331, 128, %s333, [#allocation4]
    $region61: #{tpu_custom_call.1} parent=1 // pred_fallthru
      _
    // Predicated region
    $region62: #{tpu_custom_call.1} parent=1 // pred_check
      _
    $region63: #{tpu_custom_call.1} parent=1 // pred_check_branch
      %337 = sbr.rel (0) target = $region65
    $region64: #{tpu_custom_call.1} parent=1 // pred_region
      %339 = dma.done [#allocation4], 128
    $region65: #{tpu_custom_call.1} parent=1 // pred_fallthru
      _
    %340 = vsyncpa [#allocation3], 1
    %341 = vsyncpa [#allocation6], 1
    %342 = vsyncpa [#allocation9], 1
    %343 = vsyncpa [#allocation4], 1

</llo_original>
